<compile_context>
chip_gen: v7x
topology: tpu7x:2x2x1
jax: 0.10.0
libtpu: 0.0.40
codegen_flags: <defaults>
</compile_context>

<pallas_src>
import jax
import jax.numpy as jnp
from jax.experimental import pallas as pl
from jax.experimental.pallas import tpu as pltpu


def _round_up(x, m):
    return (x + m - 1) // m * m


def _reverse_func_kernel(t_ref, mul_ref, y_ref, w1_ref, b1_ref, wt_ref,
                         w2_ref, b2_ref, o_ref):
    i = pl.program_id(0)
    neg_t = -t_ref[i]            # time reversal: base_func evaluated at -t
    mul = mul_ref[0]             # runtime scale (SMEM scalar, no recompiles)

    # Hidden-layer bias computed once at (1, H) — not per batch row.
    bias = b1_ref[...] + neg_t * wt_ref[...]

    # Hidden layer: y @ W1 (MXU, f32 acc) + bias, tanh on EUP.
    h = jnp.dot(y_ref[...], w1_ref[...], preferred_element_type=jnp.float32)
    h = jnp.tanh(h + bias)

    # Output layer: h @ W2 + b2, scaled by mul.
    out = jnp.dot(h, w2_ref[...], preferred_element_type=jnp.float32)
    out = out + b2_ref[...]
    o_ref[...] = (mul * out).astype(o_ref.dtype)


def reverse_func_forward_batched(t, y, params, mul=1.0):
    """mul * base_func(-t_i, y_i) for a batch of N evaluations.

    t: (N,) times, y: (N, B, D). Returns (N, B, D) float32.
    """
    w1, b1, wt, w2, b2 = params
    N, B, D = y.shape
    H = w1.shape[1]

    # Lane-dense padding: lanes (last dim) to multiples of 128, sublanes to 8.
    Bp = _round_up(B, 8)
    Dp = _round_up(D, 128)
    Hp = _round_up(H, 128)

    f32 = jnp.float32
    y_p = jnp.zeros((N, Bp, Dp), f32).at[:, :B, :D].set(y.astype(f32))
    w1_p = jnp.zeros((Dp, Hp), f32).at[:D, :H].set(w1.astype(f32))
    b1_p = jnp.zeros((1, Hp), f32).at[:, :H].set(b1.astype(f32))
    wt_p = jnp.zeros((1, Hp), f32).at[:, :H].set(wt.astype(f32))
    w2_p = jnp.zeros((Hp, Dp), f32).at[:H, :D].set(w2.astype(f32))
    b2_p = jnp.zeros((1, Dp), f32).at[:, :D].set(b2.astype(f32))

    t_arr = jnp.asarray(t, f32).reshape(N)
    mul_arr = jnp.asarray(mul, f32).reshape(1)

    smem = pl.BlockSpec(memory_space=pltpu.MemorySpace.SMEM)

    out = pl.pallas_call(
        _reverse_func_kernel,
        out_shape=jax.ShapeDtypeStruct((N, Bp, Dp), f32),
        grid=(N,),
        in_specs=[
            smem,                                                # t   (N,)
            smem,                                                # mul (1,)
            pl.BlockSpec((None, Bp, Dp), lambda i: (i, 0, 0)),   # y   per-eval
            pl.BlockSpec((Dp, Hp), lambda i: (0, 0)),            # W1  resident
            pl.BlockSpec((1, Hp), lambda i: (0, 0)),             # b1  resident
            pl.BlockSpec((1, Hp), lambda i: (0, 0)),             # wt  resident
            pl.BlockSpec((Hp, Dp), lambda i: (0, 0)),            # W2  resident
            pl.BlockSpec((1, Dp), lambda i: (0, 0)),             # b2  resident
        ],
        out_specs=pl.BlockSpec((None, Bp, Dp), lambda i: (i, 0, 0)),
        compiler_params=pltpu.CompilerParams(
            dimension_semantics=("parallel",)),
    )(t_arr, mul_arr, y_p, w1_p, b1_p, wt_p, w2_p, b2_p)

    return out[:, :B, :D]


def reverse_func_forward(t, y, params, mul=1.0):
    """Single-evaluation convenience wrapper: mul * base_func(-t, y)."""
    t1 = jnp.reshape(jnp.asarray(t, jnp.float32), (1,))
    return reverse_func_forward_batched(t1, y[None], params, mul)[0]


def make_params(key, dim, hidden):
    k1, k2, k3, k4, k5 = jax.random.split(key, 5)
    w1 = jax.random.normal(k1, (dim, hidden), jnp.float32) * 0.1
    b1 = jax.random.normal(k2, (1, hidden), jnp.float32) * 0.1
    wt = jax.random.normal(k3, (1, hidden), jnp.float32) * 0.1
    w2 = jax.random.normal(k4, (hidden, dim), jnp.float32) * 0.1
    b2 = jax.random.normal(k5, (1, dim), jnp.float32) * 0.1
    return (w1, b1, wt, w2, b2)


def reverse_func_reference(t, y, params, mul=1.0):
    w1, b1, wt, w2, b2 = params
    neg_t = -jnp.asarray(t, jnp.float32)                       # (N,)
    h = jnp.tanh(y @ w1 + b1 + neg_t[:, None, None] * wt)      # (N, B, H)
    return mul * (h @ w2 + b2)                                 # (N, B, D)


if __name__ == "__main__":
    # N stacked ODE-function evaluations per pallas_call (e.g. RK stages /
    # vmapped trajectories), each a (B, D) state.
    N, B, D, H = 16, 8, 32, 64
    mul = -1.0   # typical _ReverseFunc usage inside odeint_event

    key = jax.random.PRNGKey(0)
    kp, ky, kt = jax.random.split(key, 3)
    params = make_params(kp, D, H)
    y = jax.random.normal(ky, (N, B, D), jnp.float32)
    t = jax.random.uniform(kt, (N,), jnp.float32)

    out = reverse_func_forward_batched(t, y, params, mul=mul)
    out = jax.block_until_ready(out)

    ref = reverse_func_reference(t, y, params, mul=mul)
    assert out.shape == (N, B, D)
    assert jnp.allclose(out, ref, atol=1e-5, rtol=1e-5), "mismatch vs reference"

    # Also exercise the single-eval wrapper (same kernel, N=1).
    out1 = jax.block_until_ready(reverse_func_forward(t[0], y[0], params, mul=mul))
    assert jnp.allclose(out1, ref[0], atol=1e-5, rtol=1e-5), "single-eval mismatch"

    print("KERNEL_OK")
</pallas_src>

<mosaic_0001>
module attributes {stable_mosaic.version = 11 : i64} {
  func.func @_reverse_func_kernel(%arg0: i32, %arg1: memref<16xf32, #tpu.memory_space<smem>>, %arg2: memref<1xf32, #tpu.memory_space<smem>>, %arg3: memref<1x8x128xf32, #tpu.memory_space<vmem>>, %arg4: memref<128x128xf32, #tpu.memory_space<vmem>>, %arg5: memref<1x128xf32, #tpu.memory_space<vmem>>, %arg6: memref<1x128xf32, #tpu.memory_space<vmem>>, %arg7: memref<128x128xf32, #tpu.memory_space<vmem>>, %arg8: memref<1x128xf32, #tpu.memory_space<vmem>>, %arg9: memref<1x8x128xf32, #tpu.memory_space<vmem>>) attributes {dimension_semantics = [#tpu.dimension_semantics<parallel>], iteration_bounds = array<i64: 16>, scalar_prefetch = 0 : i64, scratch_operands = 0 : i64, tpu.core_type = #tpu.core_type<tc>, window_params = [{transform_indices = @transform_0, window_bounds = array<i64: 16>}, {transform_indices = @transform_1, window_bounds = array<i64: 1>}, {transform_indices = @transform_2, window_bounds = array<i64: 1, 8, 128>}, {pipeline_mode = #tpu.pipeline_mode<synchronous>, transform_indices = @transform_3, window_bounds = array<i64: 128, 128>}, {pipeline_mode = #tpu.pipeline_mode<synchronous>, transform_indices = @transform_4, window_bounds = array<i64: 1, 128>}, {pipeline_mode = #tpu.pipeline_mode<synchronous>, transform_indices = @transform_5, window_bounds = array<i64: 1, 128>}, {pipeline_mode = #tpu.pipeline_mode<synchronous>, transform_indices = @transform_6, window_bounds = array<i64: 128, 128>}, {pipeline_mode = #tpu.pipeline_mode<synchronous>, transform_indices = @transform_7, window_bounds = array<i64: 1, 128>}, {transform_indices = @transform_8, window_bounds = array<i64: 1, 8, 128>}]} {
    %0 = arith.index_cast %arg0 : i32 to index
    %1 = memref.load %arg1[%0] : memref<16xf32, #tpu.memory_space<smem>>
    %cst = arith.constant 0.000000e+00 : f32
    %2 = arith.subf %cst, %1 : f32
    %c0 = arith.constant 0 : index
    %3 = memref.load %arg2[%c0] : memref<1xf32, #tpu.memory_space<smem>>
    %c0_0 = arith.constant 0 : index
    %c0_1 = arith.constant 0 : index
    %4 = vector.load %arg5[%c0_0, %c0_1] : memref<1x128xf32, #tpu.memory_space<vmem>>, vector<1x128xf32>
    %c0_2 = arith.constant 0 : index
    %c0_3 = arith.constant 0 : index
    %5 = vector.load %arg6[%c0_2, %c0_3] : memref<1x128xf32, #tpu.memory_space<vmem>>, vector<1x128xf32>
    %6 = vector.broadcast %2 : f32 to vector<1x128xf32>
    %7 = arith.mulf %6, %5 : vector<1x128xf32>
    %8 = arith.addf %4, %7 : vector<1x128xf32>
    %c0_4 = arith.constant 0 : index
    %c0_5 = arith.constant 0 : index
    %c0_6 = arith.constant 0 : index
    %9 = vector.load %arg3[%c0_4, %c0_5, %c0_6] : memref<1x8x128xf32, #tpu.memory_space<vmem>>, vector<1x8x128xf32>
    %10 = vector.shape_cast %9 : vector<1x8x128xf32> to vector<8x128xf32>
    %c0_7 = arith.constant 0 : index
    %c0_8 = arith.constant 0 : index
    %11 = vector.load %arg4[%c0_7, %c0_8] : memref<128x128xf32, #tpu.memory_space<vmem>>, vector<128x128xf32>
    %cst_9 = arith.constant dense<0.000000e+00> : vector<8x128xf32>
    %12 = tpu.matmul %10, %11, %cst_9 {dimension_numbers = #tpu.dot_dimension_numbers<[1], [0], [0], [1], [0, 0, 1, 1], [], []>} : vector<8x128xf32>, vector<128x128xf32>, vector<8x128xf32> -> vector<8x128xf32>
    %13 = vector.broadcast %8 : vector<1x128xf32> to vector<8x128xf32>
    %14 = arith.addf %12, %13 : vector<8x128xf32>
    %15 = math.tanh %14 : vector<8x128xf32>
    %c0_10 = arith.constant 0 : index
    %c0_11 = arith.constant 0 : index
    %16 = vector.load %arg7[%c0_10, %c0_11] : memref<128x128xf32, #tpu.memory_space<vmem>>, vector<128x128xf32>
    %cst_12 = arith.constant dense<0.000000e+00> : vector<8x128xf32>
    %17 = tpu.matmul %15, %16, %cst_12 {dimension_numbers = #tpu.dot_dimension_numbers<[1], [0], [0], [1], [0, 0, 1, 1], [], []>} : vector<8x128xf32>, vector<128x128xf32>, vector<8x128xf32> -> vector<8x128xf32>
    %c0_13 = arith.constant 0 : index
    %c0_14 = arith.constant 0 : index
    %18 = vector.load %arg8[%c0_13, %c0_14] : memref<1x128xf32, #tpu.memory_space<vmem>>, vector<1x128xf32>
    %19 = vector.broadcast %18 : vector<1x128xf32> to vector<8x128xf32>
    %20 = arith.addf %17, %19 : vector<8x128xf32>
    %21 = vector.broadcast %3 : f32 to vector<8x128xf32>
    %22 = arith.mulf %21, %20 : vector<8x128xf32>
    %c0_15 = arith.constant 0 : index
    %c0_16 = arith.constant 0 : index
    %c0_17 = arith.constant 0 : index
    %23 = vector.load %arg9[%c0_15, %c0_16, %c0_17] : memref<1x8x128xf32, #tpu.memory_space<vmem>>, vector<1x8x128xf32>
    %24 = vector.shape_cast %23 : vector<1x8x128xf32> to vector<8x128xf32>
    %25 = vector.shape_cast %22 : vector<8x128xf32> to vector<1x8x128xf32>
    tpu.vector_store %arg9[%c0_15, %c0_16, %c0_17], %25 {strides = array<i32>} : memref<1x8x128xf32, #tpu.memory_space<vmem>>, vector<1x8x128xf32>,
    return
  }
  func.func @transform_0(%arg0: i32) -> i32 {
    %c0_i32 = arith.constant 0 : i32
    %c0_i32_0 = arith.constant 0 : i32
    return %c0_i32 : i32
  }
  func.func @transform_1(%arg0: i32) -> i32 {
    %c0_i32 = arith.constant 0 : i32
    %c0_i32_0 = arith.constant 0 : i32
    return %c0_i32 : i32
  }
  func.func @transform_2(%arg0: i32) -> (i32, i32, i32) {
    %c0_i32 = arith.constant 0 : i32
    %c0_i32_0 = arith.constant 0 : i32
    %c0_i32_1 = arith.constant 0 : i32
    return %arg0, %c0_i32, %c0_i32_0 : i32, i32, i32
  }
  func.func @transform_3(%arg0: i32) -> (i32, i32) {
    %c0_i32 = arith.constant 0 : i32
    %c0_i32_0 = arith.constant 0 : i32
    %c0_i32_1 = arith.constant 0 : i32
    return %c0_i32, %c0_i32_0 : i32, i32
  }
  func.func @transform_4(%arg0: i32) -> (i32, i32) {
    %c0_i32 = arith.constant 0 : i32
    %c0_i32_0 = arith.constant 0 : i32
    %c0_i32_1 = arith.constant 0 : i32
    return %c0_i32, %c0_i32_0 : i32, i32
  }
  func.func @transform_5(%arg0: i32) -> (i32, i32) {
    %c0_i32 = arith.constant 0 : i32
    %c0_i32_0 = arith.constant 0 : i32
    %c0_i32_1 = arith.constant 0 : i32
    return %c0_i32, %c0_i32_0 : i32, i32
  }
  func.func @transform_6(%arg0: i32) -> (i32, i32) {
    %c0_i32 = arith.constant 0 : i32
    %c0_i32_0 = arith.constant 0 : i32
    %c0_i32_1 = arith.constant 0 : i32
    return %c0_i32, %c0_i32_0 : i32, i32
  }
  func.func @transform_7(%arg0: i32) -> (i32, i32) {
    %c0_i32 = arith.constant 0 : i32
    %c0_i32_0 = arith.constant 0 : i32
    %c0_i32_1 = arith.constant 0 : i32
    return %c0_i32, %c0_i32_0 : i32, i32
  }
  func.func @transform_8(%arg0: i32) -> (i32, i32, i32) {
    %c0_i32 = arith.constant 0 : i32
    %c0_i32_0 = arith.constant 0 : i32
    %c0_i32_1 = arith.constant 0 : i32
    return %arg0, %c0_i32, %c0_i32_0 : i32, i32, i32
  }
}

</mosaic_0001>

<llo_original>
// kernel: tpu_custom_call.1
$region0: #{tpu_custom_call.1}
  #allocation0 [shape = 'u32[]', space=smem, size = 0x4, offset = 0x4, fixed_abs, tag = 'smem constant byte address 0x4 - core index']
  #allocation1 [shape = 'u32[144,128]{1,0:T(1,128)}', space=vmem, size = 0x12000, scoped, tag = 'internal scratch']
  #allocation2 [shape = 'f32[1]{0:T(128)S(6)}', space=smem, size = 0x200, scoped, tag = 'scoped memory for tpu_custom_call.1']
  %s0 = inlined_call_operand.vmem [shape: f32[16], index: 0, kind: input, shape index: {}]
  %s1 = inlined_call_operand.<no memory space> [shape: f32[1], index: 1, kind: input, shape index: {}]
  %s2 = inlined_call_operand.hbm [shape: f32[16,8,128], index: 2, kind: input, shape index: {}]
  %s3 = inlined_call_operand.hbm [shape: f32[128,128], index: 3, kind: input, shape index: {}]
  %s4 = inlined_call_operand.vmem [shape: f32[1,128], index: 4, kind: input, shape index: {}]
  %s5 = inlined_call_operand.vmem [shape: f32[1,128], index: 5, kind: input, shape index: {}]
  %s6 = inlined_call_operand.hbm [shape: f32[128,128], index: 6, kind: input, shape index: {}]
  %s7 = inlined_call_operand.vmem [shape: f32[1,128], index: 7, kind: input, shape index: {}]
  %s8 = inlined_call_operand.hbm [shape: f32[16,8,128], index: 8, kind: output, shape index: {}]
  %s9 = sld [smem:[#allocation0]]
  $region81: #{tpu_custom_call.1} parent=0
    _
  %s11 = ssub.s32 1, %s9
  %s12 = scalar_select 0, %s11, %s9
  %13 = sst [smem:[#allocation2]] %s1
  $region1: #{tpu_custom_call.1} parent=0
    #allocation3 [shape = 'u8[512]{0}', space=smem, size = 0x200, scoped, tag = 'input window, operand 0, single buffered']
    #allocation4 [shape = 's32[2]{0}', space=sflag, size = 0x8, scoped, tag = 'scoped memory for tpu_custom_call.1']
    #allocation5 [shape = 's32[2]{0}', space=sflag, size = 0x8, scoped, tag = 'scoped memory for tpu_custom_call.1']
    #allocation6 [shape = 's32[2]{0}', space=sflag, size = 0x8, scoped, tag = 'scoped memory for tpu_custom_call.1']
    #allocation7 [shape = 'u8[8192]{0}', space=vmem, size = 0x2000, scoped, tag = 'input window, operand 2']
    #allocation8 [shape = 'u8[65536]{0}', space=vmem, size = 0x10000, scoped, tag = 'input window, operand 3, single buffered']
    #allocation9 [shape = 's32[1]{0}', space=sflag, size = 0x4, scoped, tag = 'scoped memory for tpu_custom_call.1']
    #allocation10 [shape = 'u8[65536]{0}', space=vmem, size = 0x10000, scoped, tag = 'input window, operand 6, single buffered']
    #allocation11 [shape = 'u8[8192]{0}', space=vmem, size = 0x2000, scoped, tag = 'output window, operand 0']
    %14 = vsyncpa [#allocation6], 0
    %15 = vsyncpa [#allocation4], 0
    %s16 = scalar_lea.sflag [#allocation4], 1
    %17 = vsyncpa %s16, 0
    %18 = vsyncpa [#allocation9], 0
    %19 = vsyncpa [#allocation5], 0
    %s20 = scalar_lea.sflag [#allocation5], 1
    %21 = vsyncpa %s20, 0
    loop: start=0, step=1, limit=18
    $region2: #{tpu_custom_call.1} parent=1 // loop_pre_header
      _
    $region3: #{tpu_custom_call.1} parent=1 // loop_header
      %s23 = sphi 0, %s27
      %p24 = scmp.ge.s32.totalorder %s23, 18
      %s31 = sphi 0, %s31
      %s33 = sphi 0, %s31
      %s34 = sphi 0, %s33
      %s48 = sphi 0, %s34
      %s52 = sphi 0, %s52
      %s54 = sphi 0, %s52
      %s55 = sphi 0, %s54
      %s69 = sphi 0, %s55
      %s75 = sphi 0, %s77
      %s78 = sphi 0, %s75
      %s79 = sphi 0, %s78
      %s95 = sphi 0, %s79
      %s99 = sphi 0, %s99
      %s101 = sphi 0, %s99
      %s102 = sphi 0, %s101
      %s116 = sphi 0, %s102
      %s120 = sphi 0, %s120
      %s122 = sphi 0, %s120
      %s123 = sphi 0, %s122
      %s137 = sphi 0, %s123
      %s141 = sphi 0, %s141
      %s143 = sphi 0, %s141
      %s144 = sphi 0, %s143
      %s158 = sphi 0, %s144
      %s162 = sphi 0, %s162
      %s164 = sphi 0, %s162
      %s165 = sphi 0, %s164
      %s179 = sphi 0, %s165
      %s183 = sphi 0, %s183
      %s185 = sphi 0, %s183
      %s186 = sphi 0, %s185
      %s200 = sphi 0, %s186
      %s206 = sphi 0, %s208
      %s209 = sphi 0, %s206
      %s210 = sphi 0, %s209
      %s226 = sphi 0, %s210
    $region4: #{tpu_custom_call.1} parent=1 // loop_header_branch
      %26 = sbr.rel (%p24) target = $region8
    $region5: #{tpu_custom_call.1} parent=1 // loop_body
      %s28 = ssub.s32 %s23, 1
      %s29 = ssub.s32 %s23, 2
      %s30 = sadd.s32 %s23, 1
      %s32 = sadd.s32 %s31, 1
      %p35 = scmp.eq.s32.totalorder %s23, 15
      %p36 = scmp.ne.s32.totalorder %s31, %s33
      %p37 = scmp.eq.s32.totalorder %s23, 0
      %p38 = por %p36, %p37
      %p39 = scmp.ne.s32.totalorder %s31, %s33
      %p40 = scmp.eq.s32.totalorder %s28, 15
      %p41 = por %p39, %p40
      %p42 = scmp.ne.s32.totalorder %s33, %s34
      %p43 = scmp.eq.s32.totalorder %s28, 0
      %p44 = por %p42, %p43
      %p45 = scmp.ne.s32.totalorder %s33, %s34
      %p46 = scmp.eq.s32.totalorder %s29, 15
      %p47 = por %p45, %p46
      %p49 = scmp.ne.s32.totalorder %s34, %s48
      %p50 = scmp.eq.s32.totalorder %s29, 0
      %p51 = por %p49, %p50
      %s53 = sadd.s32 %s52, 1
      %p56 = scmp.eq.s32.totalorder %s23, 15
      %p57 = scmp.ne.s32.totalorder %s52, %s54
      %p58 = scmp.eq.s32.totalorder %s23, 0
      %p59 = por %p57, %p58
      %p60 = scmp.ne.s32.totalorder %s52, %s54
      %p61 = scmp.eq.s32.totalorder %s28, 15
      %p62 = por %p60, %p61
      %p63 = scmp.ne.s32.totalorder %s54, %s55
      %p64 = scmp.eq.s32.totalorder %s28, 0
      %p65 = por %p63, %p64
      %p66 = scmp.ne.s32.totalorder %s54, %s55
      %p67 = scmp.eq.s32.totalorder %s29, 15
      %p68 = por %p66, %p67
      %p70 = scmp.ne.s32.totalorder %s55, %s69
      %p71 = scmp.eq.s32.totalorder %s29, 0
      %p72 = por %p70, %p71
      %s73 = ssub.s32 %s23, %s30
      %p74 = scmp.eq.s32.totalorder %s73, 0
      %s76 = sadd.s32 %s75, 1
      %s77 = scalar_select %p74, %s75, %s76
      %p80 = pneg %p74
      %p81 = scmp.eq.s32.totalorder %s23, 15
      %p82 = por %p80, %p81
      %p83 = scmp.ne.s32.totalorder %s75, %s78
      %p84 = scmp.eq.s32.totalorder %s23, 0
      %p85 = por %p83, %p84
      %p86 = scmp.ne.s32.totalorder %s75, %s78
      %p87 = scmp.eq.s32.totalorder %s28, 15
      %p88 = por %p86, %p87
      %p89 = scmp.ne.s32.totalorder %s78, %s79
      %p90 = scmp.eq.s32.totalorder %s28, 0
      %p91 = por %p89, %p90
      %p92 = scmp.ne.s32.totalorder %s78, %s79
      %p93 = scmp.eq.s32.totalorder %s29, 15
      %p94 = por %p92, %p93
      %p96 = scmp.ne.s32.totalorder %s79, %s95
      %p97 = scmp.eq.s32.totalorder %s29, 0
      %p98 = por %p96, %p97
      %s100 = sadd.s32 %s99, 1
      %p103 = scmp.eq.s32.totalorder %s23, 15
      %p104 = scmp.ne.s32.totalorder %s99, %s101
      %p105 = scmp.eq.s32.totalorder %s23, 0
      %p106 = por %p104, %p105
      %p107 = scmp.ne.s32.totalorder %s99, %s101
      %p108 = scmp.eq.s32.totalorder %s28, 15
      %p109 = por %p107, %p108
      %p110 = scmp.ne.s32.totalorder %s101, %s102
      %p111 = scmp.eq.s32.totalorder %s28, 0
      %p112 = por %p110, %p111
      %p113 = scmp.ne.s32.totalorder %s101, %s102
      %p114 = scmp.eq.s32.totalorder %s29, 15
      %p115 = por %p113, %p114
      %p117 = scmp.ne.s32.totalorder %s102, %s116
      %p118 = scmp.eq.s32.totalorder %s29, 0
      %p119 = por %p117, %p118
      %s121 = sadd.s32 %s120, 1
      %p124 = scmp.eq.s32.totalorder %s23, 15
      %p125 = scmp.ne.s32.totalorder %s120, %s122
      %p126 = scmp.eq.s32.totalorder %s23, 0
      %p127 = por %p125, %p126
      %p128 = scmp.ne.s32.totalorder %s120, %s122
      %p129 = scmp.eq.s32.totalorder %s28, 15
      %p130 = por %p128, %p129
      %p131 = scmp.ne.s32.totalorder %s122, %s123
      %p132 = scmp.eq.s32.totalorder %s28, 0
      %p133 = por %p131, %p132
      %p134 = scmp.ne.s32.totalorder %s122, %s123
      %p135 = scmp.eq.s32.totalorder %s29, 15
      %p136 = por %p134, %p135
      %p138 = scmp.ne.s32.totalorder %s123, %s137
      %p139 = scmp.eq.s32.totalorder %s29, 0
      %p140 = por %p138, %p139
      %s142 = sadd.s32 %s141, 1
      %p145 = scmp.eq.s32.totalorder %s23, 15
      %p146 = scmp.ne.s32.totalorder %s141, %s143
      %p147 = scmp.eq.s32.totalorder %s23, 0
      %p148 = por %p146, %p147
      %p149 = scmp.ne.s32.totalorder %s141, %s143
      %p150 = scmp.eq.s32.totalorder %s28, 15
      %p151 = por %p149, %p150
      %p152 = scmp.ne.s32.totalorder %s143, %s144
      %p153 = scmp.eq.s32.totalorder %s28, 0
      %p154 = por %p152, %p153
      %p155 = scmp.ne.s32.totalorder %s143, %s144
      %p156 = scmp.eq.s32.totalorder %s29, 15
      %p157 = por %p155, %p156
      %p159 = scmp.ne.s32.totalorder %s144, %s158
      %p160 = scmp.eq.s32.totalorder %s29, 0
      %p161 = por %p159, %p160
      %s163 = sadd.s32 %s162, 1
      %p166 = scmp.eq.s32.totalorder %s23, 15
      %p167 = scmp.ne.s32.totalorder %s162, %s164
      %p168 = scmp.eq.s32.totalorder %s23, 0
      %p169 = por %p167, %p168
      %p170 = scmp.ne.s32.totalorder %s162, %s164
      %p171 = scmp.eq.s32.totalorder %s28, 15
      %p172 = por %p170, %p171
      %p173 = scmp.ne.s32.totalorder %s164, %s165
      %p174 = scmp.eq.s32.totalorder %s28, 0
      %p175 = por %p173, %p174
      %p176 = scmp.ne.s32.totalorder %s164, %s165
      %p177 = scmp.eq.s32.totalorder %s29, 15
      %p178 = por %p176, %p177
      %p180 = scmp.ne.s32.totalorder %s165, %s179
      %p181 = scmp.eq.s32.totalorder %s29, 0
      %p182 = por %p180, %p181
      %s184 = sadd.s32 %s183, 1
      %p187 = scmp.eq.s32.totalorder %s23, 15
      %p188 = scmp.ne.s32.totalorder %s183, %s185
      %p189 = scmp.eq.s32.totalorder %s23, 0
      %p190 = por %p188, %p189
      %p191 = scmp.ne.s32.totalorder %s183, %s185
      %p192 = scmp.eq.s32.totalorder %s28, 15
      %p193 = por %p191, %p192
      %p194 = scmp.ne.s32.totalorder %s185, %s186
      %p195 = scmp.eq.s32.totalorder %s28, 0
      %p196 = por %p194, %p195
      %p197 = scmp.ne.s32.totalorder %s185, %s186
      %p198 = scmp.eq.s32.totalorder %s29, 15
      %p199 = por %p197, %p198
      %p201 = scmp.ne.s32.totalorder %s186, %s200
      %p202 = scmp.eq.s32.totalorder %s29, 0
      %p203 = por %p201, %p202
      %s204 = ssub.s32 %s23, %s30
      %p205 = scmp.eq.s32.totalorder %s204, 0
      %s207 = sadd.s32 %s206, 1
      %s208 = scalar_select %p205, %s206, %s207
      %p211 = pneg %p205
      %p212 = scmp.eq.s32.totalorder %s23, 15
      %p213 = por %p211, %p212
      %p214 = scmp.ne.s32.totalorder %s206, %s209
      %p215 = scmp.eq.s32.totalorder %s23, 0
      %p216 = por %p214, %p215
      %p217 = scmp.ne.s32.totalorder %s206, %s209
      %p218 = scmp.eq.s32.totalorder %s28, 15
      %p219 = por %p217, %p218
      %p220 = scmp.ne.s32.totalorder %s209, %s210
      %p221 = scmp.eq.s32.totalorder %s28, 0
      %p222 = por %p220, %p221
      %p223 = scmp.ne.s32.totalorder %s209, %s210
      %p224 = scmp.eq.s32.totalorder %s29, 15
      %p225 = por %p223, %p224
      %p227 = scmp.ne.s32.totalorder %s210, %s226
      %p228 = scmp.eq.s32.totalorder %s29, 0
      %p229 = por %p227, %p228
      %p230 = scmp.le.s32.totalorder 1, %s23
      %p231 = scmp.lt.s32.totalorder %s23, 17
      %p232 = pnand %p230, %p231
      %p233 = pneg %p232
      // Predicated region
      $region9: #{tpu_custom_call.1} parent=5 // pred_check
        _
      $region10: #{tpu_custom_call.1} parent=5 // pred_check_branch
        %235 = sbr.rel (%p232) target = $region12
      $region11: #{tpu_custom_call.1} parent=5 // pred_region
        %s236 = ssub.s32 %s23, 1
        // Predicated region
        $region13: #{tpu_custom_call.1} parent=11 // pred_check
          %p237 = pneg %p44
        $region14: #{tpu_custom_call.1} parent=11 // pred_check_branch
          %239 = sbr.rel (%p237) target = $region16
        $region15: #{tpu_custom_call.1} parent=11 // pred_region
          %s241 = ssub.s32 16, 16
          %242 = vsyncadd [#allocation6], %s241
          %s244 = sshll.u32 %s0, 4
          %s245 = int_to_ptr.vmem [resolvable:$true] %s244
          %247 = dma.vmem_to_smem %s245, 16, [#allocation3], [#allocation6]
        $region16: #{tpu_custom_call.1} parent=11 // pred_fallthru
          _
        // Predicated region
        $region17: #{tpu_custom_call.1} parent=11 // pred_check
          %p248 = pneg %p65
        $region18: #{tpu_custom_call.1} parent=11 // pred_check_branch
          %250 = sbr.rel (%p248) target = $region20
        $region19: #{tpu_custom_call.1} parent=11 // pred_region
          _
        $region20: #{tpu_custom_call.1} parent=11 // pred_fallthru
          _
        // Predicated region
        $region21: #{tpu_custom_call.1} parent=11 // pred_check
          %p251 = pneg %p112
        $region22: #{tpu_custom_call.1} parent=11 // pred_check_branch
          %253 = sbr.rel (%p251) target = $region24
        $region23: #{tpu_custom_call.1} parent=11 // pred_region
          %s255 = ssub.s32 2048, 2048
          %256 = vsyncadd [#allocation9], %s255
          %s257 = sshll.u32 [#allocation8], 4
          %s258 = int_to_ptr.vmem [resolvable:$true] %s257
          %263 = dma.hbm_to_vmem [thread:$0]  %s3, 2048, %s258, [#allocation9], 128, 128, 8
        $region24: #{tpu_custom_call.1} parent=11 // pred_fallthru
          _
        // Predicated region
        $region25: #{tpu_custom_call.1} parent=11 // pred_check
          %p264 = pneg %p133
        $region26: #{tpu_custom_call.1} parent=11 // pred_check_branch
          %266 = sbr.rel (%p264) target = $region28
        $region27: #{tpu_custom_call.1} parent=11 // pred_region
          _
        $region28: #{tpu_custom_call.1} parent=11 // pred_fallthru
          _
        // Predicated region
        $region29: #{tpu_custom_call.1} parent=11 // pred_check
          %p267 = pneg %p154
        $region30: #{tpu_custom_call.1} parent=11 // pred_check_branch
          %269 = sbr.rel (%p267) target = $region32
        $region31: #{tpu_custom_call.1} parent=11 // pred_region
          _
        $region32: #{tpu_custom_call.1} parent=11 // pred_fallthru
          _
        // Predicated region
        $region33: #{tpu_custom_call.1} parent=11 // pred_check
          %p270 = pneg %p175
        $region34: #{tpu_custom_call.1} parent=11 // pred_check_branch
          %272 = sbr.rel (%p270) target = $region36
        $region35: #{tpu_custom_call.1} parent=11 // pred_region
          %s274 = ssub.s32 2048, 2048
          %275 = vsyncadd [#allocation9], %s274
          %s276 = sshll.u32 [#allocation10], 4
          %s277 = int_to_ptr.vmem [resolvable:$true] %s276
          %282 = dma.hbm_to_vmem [thread:$0]  %s6, 2048, %s277, [#allocation9], 128, 128, 8
        $region36: #{tpu_custom_call.1} parent=11 // pred_fallthru
          _
        // Predicated region
        $region37: #{tpu_custom_call.1} parent=11 // pred_check
          %p283 = pneg %p196
        $region38: #{tpu_custom_call.1} parent=11 // pred_check_branch
          %285 = sbr.rel (%p283) target = $region40
        $region39: #{tpu_custom_call.1} parent=11 // pred_region
          _
        $region40: #{tpu_custom_call.1} parent=11 // pred_fallthru
          _
      $region12: #{tpu_custom_call.1} parent=5 // pred_fallthru
        _
      %p286 = scmp.lt.s32.totalorder %s23, 16
      // Predicated region
      $region41: #{tpu_custom_call.1} parent=5 // pred_check
        %p287 = pneg %p286
      $region42: #{tpu_custom_call.1} parent=5 // pred_check_branch
        %289 = sbr.rel (%p287) target = $region44
      $region43: #{tpu_custom_call.1} parent=5 // pred_region
        // Predicated region
        $region45: #{tpu_custom_call.1} parent=43 // pred_check
          %p290 = pneg %p85
        $region46: #{tpu_custom_call.1} parent=43 // pred_check_branch
          %292 = sbr.rel (%p290) target = $region48
        $region47: #{tpu_custom_call.1} parent=43 // pred_region
          %s293 = sand.u32 %s75, 1
          %s294 = scalar_lea.sflag [#allocation4], %s293
          %s295 = sand.u32 %s75, 1
          %s296 = smul.addr %s295, 8
          %s297 = scalar_lea.vmem [#allocation7], %s296
          %s299 = ssub.s32 128, 128
          %300 = vsyncadd %s294, %s299
          %s301 = smul.addr %s23, 128
          %s302 = scalar_lea.hbm %s2, %s301
          %s304 = sshll.u32 %s297, 4
          %s305 = int_to_ptr.vmem [resolvable:$true] %s304
          %307 = dma.hbm_to_vmem [thread:$0]  %s302, 128, %s305, %s294
        $region48: #{tpu_custom_call.1} parent=43 // pred_fallthru
          _
      $region44: #{tpu_custom_call.1} parent=5 // pred_fallthru
        _
      %p308 = scmp.le.s32.totalorder 1, %s23
      %p309 = scmp.lt.s32.totalorder %s23, 17
      %p310 = pnand %p308, %p309
      %p311 = pneg %p310
      // Predicated region
      $region49: #{tpu_custom_call.1} parent=5 // pred_check
        _
      $region50: #{tpu_custom_call.1} parent=5 // pred_check_branch
        %313 = sbr.rel (%p310) target = $region52
      $region51: #{tpu_custom_call.1} parent=5 // pred_region
        %s314 = ssub.s32 %s23, 1
        // Predicated region
        $region53: #{tpu_custom_call.1} parent=51 // pred_check
          %p315 = pneg %p44
        $region54: #{tpu_custom_call.1} parent=51 // pred_check_branch
          %317 = sbr.rel (%p315) target = $region56
        $region55: #{tpu_custom_call.1} parent=51 // pred_region
          %318 = dma.done [#allocation6], 16
        $region56: #{tpu_custom_call.1} parent=51 // pred_fallthru
          _
        %s319 = sand.u32 %s78, 1
        %s320 = scalar_lea.sflag [#allocation4], %s319
        %s321 = sand.u32 %s78, 1
        %s322 = smul.addr %s321, 8
        %s323 = scalar_lea.vmem [#allocation7], %s322
        // Predicated region
        $region57: #{tpu_custom_call.1} parent=51 // pred_check
          %p324 = pneg %p91
        $region58: #{tpu_custom_call.1} parent=51 // pred_check_branch
          %326 = sbr.rel (%p324) target = $region60
        $region59: #{tpu_custom_call.1} parent=51 // pred_region
          %327 = dma.done %s320, 128
        $region60: #{tpu_custom_call.1} parent=51 // pred_fallthru
          _
        // Predicated region
        $region61: #{tpu_custom_call.1} parent=51 // pred_check
          %p328 = pneg %p112
        $region62: #{tpu_custom_call.1} parent=51 // pred_check_branch
          %330 = sbr.rel (%p328) target = $region64
        $region63: #{tpu_custom_call.1} parent=51 // pred_region
          %331 = dma.done [#allocation9], 2048
        $region64: #{tpu_custom_call.1} parent=51 // pred_fallthru
          _
        // Predicated region
        $region65: #{tpu_custom_call.1} parent=51 // pred_check
          %p332 = pneg %p175
        $region66: #{tpu_custom_call.1} parent=51 // pred_check_branch
          %334 = sbr.rel (%p332) target = $region68
        $region67: #{tpu_custom_call.1} parent=51 // pred_region
          %335 = dma.done [#allocation9], 2048
        $region68: #{tpu_custom_call.1} parent=51 // pred_fallthru
          _
        %336 = sfence
        %p337 = pneg %p44
        %p338 = pneg %p41
        %p339 = pneg %p65
        %p340 = pneg %p62
        %s341 = sand.u32 %s78, 1
        %s342 = scalar_lea.sflag [#allocation4], %s341
        %s343 = sand.u32 %s78, 1
        %s344 = smul.addr %s343, 8
        %s345 = scalar_lea.vmem [#allocation7], %s344
        %p346 = pneg %p91
        %p347 = pneg %p88
        %p348 = pneg %p112
        %p349 = pneg %p109
        %p350 = pneg %p133
        %p351 = pneg %p130
        %p352 = pneg %p154
        %p353 = pneg %p151
        %p354 = pneg %p175
        %p355 = pneg %p172
        %p356 = pneg %p196
        %p357 = pneg %p193
        %p358 = pneg %p222
        %p359 = pneg %p219
        %s360 = sand.u32 %s209, 1
        %s361 = scalar_lea.sflag [#allocation5], %s360
        %s362 = sand.u32 %s209, 1
        %s363 = smul.addr %s362, 8
        %s364 = scalar_lea.vmem [#allocation11], %s363
        %s365 = sld [smem:[#allocation3 + %s28]]
        %s366 = ssub.f32 0.0, %s365
        %s367 = sld [smem:[#allocation2]]
        %v368 = vld [vmem:[%s4] sm:$0x1]
        %v369 = vld [vmem:[%s5] sm:$0x1]
        %v370 = vstv %s366
        %v371 = vmul.f32 %v370, %v369
        %v372 = vadd.f32 %v368, %v371
        %v373 = vld [vmem:[%s323] sm:$0xff]
        %v374 = vld [vmem:[#allocation8] sm:$0xff]
        %v375 = vld [vmem:[#allocation8 + $0x8] sm:$0xff]
        %v376 = vld [vmem:[#allocation8 + $0x10] sm:$0xff]
        %v377 = vld [vmem:[#allocation8 + $0x18] sm:$0xff]
        %v378 = vld [vmem:[#allocation8 + $0x20] sm:$0xff]
        %v379 = vld [vmem:[#allocation8 + $0x28] sm:$0xff]
        %v380 = vld [vmem:[#allocation8 + $0x30] sm:$0xff]
        %v381 = vld [vmem:[#allocation8 + $0x38] sm:$0xff]
        %v382 = vld [vmem:[#allocation8 + $0x40] sm:$0xff]
        %v383 = vld [vmem:[#allocation8 + $0x48] sm:$0xff]
        %v384 = vld [vmem:[#allocation8 + $0x50] sm:$0xff]
        %v385 = vld [vmem:[#allocation8 + $0x58] sm:$0xff]
        %v386 = vld [vmem:[#allocation8 + $0x60] sm:$0xff]
        %v387 = vld [vmem:[#allocation8 + $0x68] sm:$0xff]
        %v388 = vld [vmem:[#allocation8 + $0x70] sm:$0xff]
        %v389 = vld [vmem:[#allocation8 + $0x78] sm:$0xff]
        %v391 = vlaneseq
        %v392 = vshrl.u32 %v391, 7
        %v393 = vsub.s32 0, %v392
        %v394 = vrot.slane %v372, %v393
        %396 = vmatprep.subr.mxu0 0.0
        %397 = vmatpush1.msra.mxu0 %v374
        %398 = vmatprep.subr.mxu0 0.0
        %399 = vmatpush1.msra.mxu0 %v375
        %400 = vmatprep.subr.mxu0 0.0
        %401 = vmatpush1.msra.mxu0 %v376
        %402 = vmatprep.subr.mxu0 0.0
        %403 = vmatpush1.msra.mxu0 %v377
        %404 = vmatprep.subr.mxu0 0.0
        %405 = vmatpush1.msra.mxu0 %v378
        %406 = vmatprep.subr.mxu0 0.0
        %407 = vmatpush1.msra.mxu0 %v379
        %408 = vmatprep.subr.mxu0 0.0
        %409 = vmatpush1.msra.mxu0 %v380
        %410 = vmatprep.subr.mxu0 0.0
        %411 = vmatpush1.msra.mxu0 %v381
        %412 = vmatprep.subr.mxu0 0.0
        %413 = vmatpush1.msra.mxu0 %v382
        %414 = vmatprep.subr.mxu0 0.0
        %415 = vmatpush1.msra.mxu0 %v383
        %416 = vmatprep.subr.mxu0 0.0
        %417 = vmatpush1.msra.mxu0 %v384
        %418 = vmatprep.subr.mxu0 0.0
        %419 = vmatpush1.msra.mxu0 %v385
        %420 = vmatprep.subr.mxu0 0.0
        %421 = vmatpush1.msra.mxu0 %v386
        %422 = vmatprep.subr.mxu0 0.0
        %423 = vmatpush1.msra.mxu0 %v387
        %424 = vmatprep.subr.mxu0 0.0
        %425 = vmatpush1.msra.mxu0 %v388
        %426 = vmatprep.subr.mxu0 0.0
        %427 = vmatpush1.msra.mxu0 %v389
        %428 = vmatprep.subr.mxu0 0.0
        %429 = vmatpush1.msra.mxu0 0.0
        %430 = vmatprep.subr.mxu0 0.0
        %431 = vmatpush1.msra.mxu0 0.0
        %432 = vmatprep.subr.mxu0 0.0
        %433 = vmatpush1.msra.mxu0 0.0
        %434 = vmatprep.subr.mxu0 0.0
        %435 = vmatpush1.msra.mxu0 0.0
        %436 = vmatprep.subr.mxu0 0.0
        %437 = vmatpush1.msra.mxu0 0.0
        %438 = vmatprep.subr.mxu0 0.0
        %439 = vmatpush1.msra.mxu0 0.0
        %440 = vmatprep.subr.mxu0 0.0
        %441 = vmatpush1.msra.mxu0 0.0
        %442 = vmatprep.subr.mxu0 0.0
        %443 = vmatpush1.msra.mxu0 0.0
        %444 = vmatprep.subr.mxu0 0.0
        %445 = vmatpush1.msra.mxu0 0.0
        %446 = vmatprep.subr.mxu0 0.0
        %447 = vmatpush1.msra.mxu0 0.0
        %448 = vmatprep.subr.mxu0 0.0
        %449 = vmatpush1.msra.mxu0 0.0
        %450 = vmatprep.subr.mxu0 0.0
        %451 = vmatpush1.msra.mxu0 0.0
        %452 = vmatprep.subr.mxu0 0.0
        %453 = vmatpush1.msra.mxu0 0.0
        %454 = vmatprep.subr.mxu0 0.0
        %455 = vmatpush1.msra.mxu0 0.0
        %456 = vmatprep.subr.mxu0 0.0
        %457 = vmatpush1.msra.mxu0 0.0
        %458 = vmatprep.subr.mxu0 0.0
        %459 = vmatpush1.msra.mxu0 0.0
        %460 = vmatprep.mubr.f32.mxu0 0.0
        %461 = vmatmul.mubr.f32.gmra.mrb[0].mxu0 %v373
        %v462 = vpop.f32.mrb[0].mxu0
        %v463 = vadd.f32 %v394, %v462
        %v464 = vpop.f32.mrb[0].mxu0
        %465 = vdwg.mxu0
        %v466 = vtanh.pop %v463
        %v467 = vld [vmem:[#allocation10] sm:$0xff]
        %v468 = vld [vmem:[#allocation10 + $0x8] sm:$0xff]
        %v469 = vld [vmem:[#allocation10 + $0x10] sm:$0xff]
        %v470 = vld [vmem:[#allocation10 + $0x18] sm:$0xff]
        %v471 = vld [vmem:[#allocation10 + $0x20] sm:$0xff]
        %v472 = vld [vmem:[#allocation10 + $0x28] sm:$0xff]
        %v473 = vld [vmem:[#allocation10 + $0x30] sm:$0xff]
        %v474 = vld [vmem:[#allocation10 + $0x38] sm:$0xff]
        %v475 = vld [vmem:[#allocation10 + $0x40] sm:$0xff]
        %v476 = vld [vmem:[#allocation10 + $0x48] sm:$0xff]
        %v477 = vld [vmem:[#allocation10 + $0x50] sm:$0xff]
        %v478 = vld [vmem:[#allocation10 + $0x58] sm:$0xff]
        %v479 = vld [vmem:[#allocation10 + $0x60] sm:$0xff]
        %v480 = vld [vmem:[#allocation10 + $0x68] sm:$0xff]
        %v481 = vld [vmem:[#allocation10 + $0x70] sm:$0xff]
        %v482 = vld [vmem:[#allocation10 + $0x78] sm:$0xff]
        %v483 = vld [vmem:[%s7] sm:$0x1]
        %v485 = vlaneseq
        %v486 = vshrl.u32 %v485, 7
        %v487 = vsub.s32 0, %v486
        %v488 = vrot.slane %v483, %v487
        %490 = vmatprep.subr.mxu0 0.0
        %491 = vmatpush1.msra.mxu0 %v467
        %492 = vmatprep.subr.mxu0 0.0
        %493 = vmatpush1.msra.mxu0 %v468
        %494 = vmatprep.subr.mxu0 0.0
        %495 = vmatpush1.msra.mxu0 %v469
        %496 = vmatprep.subr.mxu0 0.0
        %497 = vmatpush1.msra.mxu0 %v470
        %498 = vmatprep.subr.mxu0 0.0
        %499 = vmatpush1.msra.mxu0 %v471
        %500 = vmatprep.subr.mxu0 0.0
        %501 = vmatpush1.msra.mxu0 %v472
        %502 = vmatprep.subr.mxu0 0.0
        %503 = vmatpush1.msra.mxu0 %v473
        %504 = vmatprep.subr.mxu0 0.0
        %505 = vmatpush1.msra.mxu0 %v474
        %506 = vmatprep.subr.mxu0 0.0
        %507 = vmatpush1.msra.mxu0 %v475
        %508 = vmatprep.subr.mxu0 0.0
        %509 = vmatpush1.msra.mxu0 %v476
        %510 = vmatprep.subr.mxu0 0.0
        %511 = vmatpush1.msra.mxu0 %v477
        %512 = vmatprep.subr.mxu0 0.0
        %513 = vmatpush1.msra.mxu0 %v478
        %514 = vmatprep.subr.mxu0 0.0
        %515 = vmatpush1.msra.mxu0 %v479
        %516 = vmatprep.subr.mxu0 0.0
        %517 = vmatpush1.msra.mxu0 %v480
        %518 = vmatprep.subr.mxu0 0.0
        %519 = vmatpush1.msra.mxu0 %v481
        %520 = vmatprep.subr.mxu0 0.0
        %521 = vmatpush1.msra.mxu0 %v482
        %522 = vmatprep.subr.mxu0 0.0
        %523 = vmatpush1.msra.mxu0 0.0
        %524 = vmatprep.subr.mxu0 0.0
        %525 = vmatpush1.msra.mxu0 0.0
        %526 = vmatprep.subr.mxu0 0.0
        %527 = vmatpush1.msra.mxu0 0.0
        %528 = vmatprep.subr.mxu0 0.0
        %529 = vmatpush1.msra.mxu0 0.0
        %530 = vmatprep.subr.mxu0 0.0
        %531 = vmatpush1.msra.mxu0 0.0
        %532 = vmatprep.subr.mxu0 0.0
        %533 = vmatpush1.msra.mxu0 0.0
        %534 = vmatprep.subr.mxu0 0.0
        %535 = vmatpush1.msra.mxu0 0.0
        %536 = vmatprep.subr.mxu0 0.0
        %537 = vmatpush1.msra.mxu0 0.0
        %538 = vmatprep.subr.mxu0 0.0
        %539 = vmatpush1.msra.mxu0 0.0
        %540 = vmatprep.subr.mxu0 0.0
        %541 = vmatpush1.msra.mxu0 0.0
        %542 = vmatprep.subr.mxu0 0.0
        %543 = vmatpush1.msra.mxu0 0.0
        %544 = vmatprep.subr.mxu0 0.0
        %545 = vmatpush1.msra.mxu0 0.0
        %546 = vmatprep.subr.mxu0 0.0
        %547 = vmatpush1.msra.mxu0 0.0
        %548 = vmatprep.subr.mxu0 0.0
        %549 = vmatpush1.msra.mxu0 0.0
        %550 = vmatprep.subr.mxu0 0.0
        %551 = vmatpush1.msra.mxu0 0.0
        %552 = vmatprep.subr.mxu0 0.0
        %553 = vmatpush1.msra.mxu0 0.0
        %554 = vmatprep.mubr.f32.mxu0 0.0
        %555 = vmatmul.mubr.f32.gmra.mrb[0].mxu0 %v466
        %v556 = vpop.f32.mrb[0].mxu0
        %v557 = vadd.f32 %v488, %v556
        %v558 = vpop.f32.mrb[0].mxu0
        %559 = vdwg.mxu0
        %v560 = vstv %s367
        %v561 = vmul.f32 %v560, %v557
        %562 = vst [vmem:[%s364] sm:$0xff] %v561
        %s563 = sand.u32 %s209, 1
        %s564 = scalar_lea.sflag [#allocation5], %s563
        %s565 = sand.u32 %s209, 1
        %s566 = smul.addr %s565, 8
        %s567 = scalar_lea.vmem [#allocation11], %s566
        // Predicated region
        $region69: #{tpu_custom_call.1} parent=51 // pred_check
          %p568 = pneg %p219
        $region70: #{tpu_custom_call.1} parent=51 // pred_check_branch
          %570 = sbr.rel (%p568) target = $region72
        $region71: #{tpu_custom_call.1} parent=51 // pred_region
          %s572 = ssub.s32 128, 128
          %573 = vsyncadd %s564, %s572
          %s574 = smul.addr %s28, 128
          %s575 = scalar_lea.hbm %s8, %s574
          %s577 = sshll.u32 %s567, 4
          %s578 = int_to_ptr.vmem [resolvable:$true] %s577
          %580 = dma.vmem_to_hbm [thread:$0]  %s578, 128, %s575, %s564
        $region72: #{tpu_custom_call.1} parent=51 // pred_fallthru
          _
      $region52: #{tpu_custom_call.1} parent=5 // pred_fallthru
        _
      %p581 = scmp.le.s32.totalorder 2, %s23
      // Predicated region
      $region73: #{tpu_custom_call.1} parent=5 // pred_check
        %p582 = pneg %p581
      $region74: #{tpu_custom_call.1} parent=5 // pred_check_branch
        %584 = sbr.rel (%p582) target = $region76
      $region75: #{tpu_custom_call.1} parent=5 // pred_region
        %s585 = ssub.s32 %s23, 2
        // Predicated region
        $region77: #{tpu_custom_call.1} parent=75 // pred_check
          %p586 = pneg %p225
        $region78: #{tpu_custom_call.1} parent=75 // pred_check_branch
          %588 = sbr.rel (%p586) target = $region80
        $region79: #{tpu_custom_call.1} parent=75 // pred_region
          %s589 = sand.u32 %s210, 1
          %s590 = scalar_lea.sflag [#allocation5], %s589
          %s591 = sand.u32 %s210, 1
          %s592 = smul.addr %s591, 8
          %s593 = scalar_lea.vmem [#allocation11], %s592
          %594 = dma.done %s590, 128
        $region80: #{tpu_custom_call.1} parent=75 // pred_fallthru
          _
      $region76: #{tpu_custom_call.1} parent=5 // pred_fallthru
        _
    $region6: #{tpu_custom_call.1} parent=1 // loop_footer
      %s27 = sadd.s32 1, %s23
    $region7: #{tpu_custom_call.1} parent=1 // loop_footer_branch
      %22 = sbr.rel target = $region3
    $region8: #{tpu_custom_call.1} parent=1 // loop_exit
      _
    %595 = vsyncpa [#allocation4], 1
    %s596 = scalar_lea.sflag [#allocation4], 1
    %597 = vsyncpa %s596, 1
    %598 = vsyncpa [#allocation9], 1
    %599 = vsyncpa [#allocation5], 1
    %s600 = scalar_lea.sflag [#allocation5], 1
    %601 = vsyncpa %s600, 1
    %602 = vsyncpa [#allocation6], 1
    %s603 = scalar_lea.sflag [#allocation6], 1
    %604 = vsyncpa %s603, 1

</llo_original>
